<compile_context>
chip_gen: v6e
topology: v6e:2x2x1
jax: 0.10.0
libtpu: 0.0.40
codegen_flags: <defaults>
</compile_context>

<pallas_src>
import functools

import numpy as np

import jax
import jax.numpy as jnp
from jax.experimental import pallas as pl
from jax.experimental.pallas import tpu as pltpu


def _round_up(x, m):
    return (x + m - 1) // m * m


def _make_tap_masks(H, W):
    """(9, H*W) f32 validity masks for the 9 taps of a 3x3 / pad=1 conv."""
    yy, xx = np.meshgrid(np.arange(H), np.arange(W), indexing="ij")
    masks = []
    for dh in (-1, 0, 1):
        for dw in (-1, 0, 1):
            valid = ((yy + dh >= 0) & (yy + dh < H) &
                     (xx + dw >= 0) & (xx + dw < W))
            masks.append(valid.reshape(-1))
    return np.stack(masks, 0).astype(np.float32)


def _conv_patches(xc, mask_ref, H, W):
    """Build the (9*C, H*W) patch stack for a 3x3 / stride 1 / zero-pad-1 conv.

    xc: (C, H*W) f32 with C a multiple of 8 (sublane aligned).
    mask_ref: (9, H*W) f32 tap-validity masks (zero-padding semantics).
    Tap ordering is (kh, kw) row-major, matching the flattened weights.
    """
    HW = H * W
    taps = []
    t_idx = 0
    for dh in (-1, 0, 1):
        for dw in (-1, 0, 1):
            shift = (-(dh * W + dw)) % HW          # static, non-negative
            t = pltpu.roll(xc, shift, axis=1) if shift else xc
            if dh != 0 or dw != 0:
                t = t * mask_ref[t_idx:t_idx + 1, :]   # zero out halo wraps
            taps.append(t)
            t_idx += 1
    return jnp.concatenate(taps, axis=0)           # (9*C, H*W)


def _fused_double_conv3x3_kernel(x_ref, w1_ref, b1_ref, w2_ref, b2_ref,
                                 mask_ref, o_ref, xpad_ref, *, H, W):
    """One batch element: relu(conv2(relu(conv1(x)))) with everything in VMEM.

    x_ref:   (1, Cin, H*W)        bf16
    w1_ref:  (Cout_p, 9*Cin_p)    bf16   (tap-major flattened, zero-padded)
    b1_ref:  (Cout_p, 1)          f32
    w2_ref:  (Cout_p, 9*Cout_p)   bf16
    b2_ref:  (Cout_p, 1)          f32
    mask_ref:(9, H*W)             f32
    o_ref:   (1, Cout_p, H*W)     f32
    xpad_ref:(Cin_p, H*W)         f32 scratch (channel zero-extension)
    """
    HW = H * W
    Cin = x_ref.shape[1]
    Cin_p = xpad_ref.shape[0]

    # In-kernel "padding": zero-extend channels up to a sublane multiple.
    if Cin_p != Cin:
        xpad_ref[Cin:Cin_p, :] = jnp.zeros((Cin_p - Cin, HW), jnp.float32)
    xpad_ref[0:Cin, :] = x_ref[0].astype(jnp.float32)
    x0 = xpad_ref[...]                                   # (Cin_p, HW) f32

    # ---- conv1 + ReLU : single K = 9*Cin_p matmul on the MXU -------------
    p1 = _conv_patches(x0, mask_ref, H, W).astype(jnp.bfloat16)
    y1 = jnp.dot(w1_ref[...], p1, preferred_element_type=jnp.float32)
    y1 = jnp.maximum(y1 + b1_ref[...], 0.0)              # (Cout_p, HW) f32

    # ---- conv2 + ReLU : intermediate stays on-chip ------------------------
    p2 = _conv_patches(y1, mask_ref, H, W).astype(jnp.bfloat16)
    y2 = jnp.dot(w2_ref[...], p2, preferred_element_type=jnp.float32)
    y2 = jnp.maximum(y2 + b2_ref[...], 0.0)               # (Cout_p, HW) f32

    o_ref[0] = y2.astype(o_ref.dtype)


def input_forward_nchw(x, w1, b1, w2, b2):
    """Equivalent of Input.forward: NCHW f32 in -> NCHW f32 out.

    x : (N, Cin, H, W); w1: (Cout, Cin, 3, 3); b1: (Cout,);
    w2: (Cout, Cout, 3, 3); b2: (Cout,)   (PyTorch Conv2d layouts).
    """
    N, Cin, H, W = x.shape
    Cout = w1.shape[0]
    HW = H * W
    Cin_p = _round_up(Cin, 8)
    Cout_p = _round_up(Cout, 8)

    # NCHW -> (N, Cin, H*W): trailing-dim reshape only (no transpose, no pad).
    x2 = x.reshape(N, Cin, HW).astype(jnp.bfloat16)

    # Flatten weights tap-major to lane/sublane friendly 2-D slabs (tiny, one-off).
    w1f = jnp.transpose(w1, (0, 2, 3, 1))                      # (Cout,3,3,Cin)
    w1f = jnp.pad(w1f, ((0, Cout_p - Cout), (0, 0), (0, 0), (0, Cin_p - Cin)))
    w1f = w1f.reshape(Cout_p, 9 * Cin_p).astype(jnp.bfloat16)

    w2f = jnp.transpose(w2, (0, 2, 3, 1))                      # (Cout,3,3,Cout)
    w2f = jnp.pad(w2f, ((0, Cout_p - Cout), (0, 0), (0, 0), (0, Cout_p - Cout)))
    w2f = w2f.reshape(Cout_p, 9 * Cout_p).astype(jnp.bfloat16)

    b1p = jnp.pad(b1, (0, Cout_p - Cout)).reshape(Cout_p, 1).astype(jnp.float32)
    b2p = jnp.pad(b2, (0, Cout_p - Cout)).reshape(Cout_p, 1).astype(jnp.float32)

    masks = jnp.asarray(_make_tap_masks(H, W))                 # (9, HW) f32

    kernel = functools.partial(_fused_double_conv3x3_kernel, H=H, W=W)

    out = pl.pallas_call(
        kernel,
        out_shape=jax.ShapeDtypeStruct((N, Cout_p, HW), jnp.float32),
        grid=(N,),
        in_specs=[
            pl.BlockSpec((1, Cin, HW), lambda n: (n, 0, 0)),
            pl.BlockSpec((Cout_p, 9 * Cin_p), lambda n: (0, 0)),
            pl.BlockSpec((Cout_p, 1), lambda n: (0, 0)),
            pl.BlockSpec((Cout_p, 9 * Cout_p), lambda n: (0, 0)),
            pl.BlockSpec((Cout_p, 1), lambda n: (0, 0)),
            pl.BlockSpec((9, HW), lambda n: (0, 0)),
        ],
        out_specs=pl.BlockSpec((1, Cout_p, HW), lambda n: (n, 0, 0)),
        scratch_shapes=[pltpu.VMEM((Cin_p, HW), jnp.float32)],
        compiler_params=pltpu.CompilerParams(
            dimension_semantics=("parallel",)),
    )(x2, w1f, b1p, w2f, b2p, masks)

    # Drop channel padding (no-op when Cout % 8 == 0) and restore NCHW.
    return out[:, :Cout, :].reshape(N, Cout, H, W)


input_forward = jax.jit(input_forward_nchw)


def init_params(key, input_channel, output_channel):
    """Deterministic synthetic params (PyTorch Conv2d layout: OIHW)."""
    k1, k2, k3, k4 = jax.random.split(key, 4)
    scale1 = 1.0 / jnp.sqrt(3.0 * 3.0 * input_channel)
    scale2 = 1.0 / jnp.sqrt(3.0 * 3.0 * output_channel)
    w1 = jax.random.normal(k1, (output_channel, input_channel, 3, 3),
                           jnp.float32) * scale1
    b1 = jax.random.normal(k2, (output_channel,), jnp.float32) * scale1
    w2 = jax.random.normal(k3, (output_channel, output_channel, 3, 3),
                           jnp.float32) * scale2
    b2 = jax.random.normal(k4, (output_channel,), jnp.float32) * scale2
    return (w1, b1, w2, b2)


def _reference_nchw(x, w1, b1, w2, b2):
    """Pure-JAX f32 reference (lax conv) for a sanity check."""
    def conv(x, w, b):
        y = jax.lax.conv_general_dilated(
            x, w, window_strides=(1, 1), padding="SAME",
            dimension_numbers=("NCHW", "OIHW", "NCHW"))
        return jnp.maximum(y + b[None, :, None, None], 0.0)
    return conv(conv(x, w1, b1), w2, b2)


if __name__ == "__main__":
    key = jax.random.PRNGKey(0)
    k_x, k_p = jax.random.split(key)

    N, Cin, H, W = 2, 4, 16, 16
    Cout = 8

    x = jax.random.normal(k_x, (N, Cin, H, W), jnp.float32)
    w1, b1, w2, b2 = init_params(k_p, Cin, Cout)

    out = input_forward(x, w1, b1, w2, b2)
    out = jax.block_until_ready(out)

    ref = _reference_nchw(x, w1, b1, w2, b2)
    assert out.shape == (N, Cout, H, W), out.shape
    # bf16 MXU operands (f32 accumulation) -> small tolerance vs f32 reference.
    assert jnp.allclose(out, ref, atol=3e-2, rtol=3e-2), (
        "mismatch vs reference: max err "
        f"{float(jnp.max(jnp.abs(out - ref)))}")

    print("KERNEL_OK")
</pallas_src>

<mosaic_0001>
module attributes {stable_mosaic.version = 11 : i64} {
  func.func @_fused_double_conv3x3_kernel(%arg0: i32, %arg1: memref<1x4x256xbf16, #tpu.memory_space<vmem>>, %arg2: memref<8x72xbf16, #tpu.memory_space<vmem>>, %arg3: memref<8x1xf32, #tpu.memory_space<vmem>>, %arg4: memref<8x72xbf16, #tpu.memory_space<vmem>>, %arg5: memref<8x1xf32, #tpu.memory_space<vmem>>, %arg6: memref<9x256xf32, #tpu.memory_space<vmem>>, %arg7: memref<1x8x256xf32, #tpu.memory_space<vmem>>, %arg8: memref<8x256xf32, #tpu.memory_space<vmem>>) attributes {dimension_semantics = [#tpu.dimension_semantics<parallel>], iteration_bounds = array<i64: 2>, scalar_prefetch = 0 : i64, scratch_operands = 1 : i64, tpu.core_type = #tpu.core_type<tc>, window_params = [{transform_indices = @transform_0, window_bounds = array<i64: 1, 4, 256>}, {pipeline_mode = #tpu.pipeline_mode<synchronous>, transform_indices = @transform_1, window_bounds = array<i64: 8, 72>}, {pipeline_mode = #tpu.pipeline_mode<synchronous>, transform_indices = @transform_2, window_bounds = array<i64: 8, 1>}, {pipeline_mode = #tpu.pipeline_mode<synchronous>, transform_indices = @transform_3, window_bounds = array<i64: 8, 72>}, {pipeline_mode = #tpu.pipeline_mode<synchronous>, transform_indices = @transform_4, window_bounds = array<i64: 8, 1>}, {pipeline_mode = #tpu.pipeline_mode<synchronous>, transform_indices = @transform_5, window_bounds = array<i64: 9, 256>}, {transform_indices = @transform_6, window_bounds = array<i64: 1, 8, 256>}]} {
    %cst = arith.constant 0.000000e+00 : f32
    %0 = vector.broadcast %cst : f32 to vector<4x256xf32>
    %c4 = arith.constant 4 : index
    %c0 = arith.constant 0 : index
    %1 = vector.load %arg8[%c4, %c0] : memref<8x256xf32, #tpu.memory_space<vmem>>, vector<4x256xf32>
    tpu.vector_store %arg8[%c4, %c0], %0 {strides = array<i32>} : memref<8x256xf32, #tpu.memory_space<vmem>>, vector<4x256xf32>,
    %c0_0 = arith.constant 0 : index
    %c0_1 = arith.constant 0 : index
    %c0_2 = arith.constant 0 : index
    %2 = vector.load %arg1[%c0_0, %c0_1, %c0_2] : memref<1x4x256xbf16, #tpu.memory_space<vmem>>, vector<1x4x256xbf16>
    %3 = vector.shape_cast %2 : vector<1x4x256xbf16> to vector<4x256xbf16>
    %4 = arith.extf %3 : vector<4x256xbf16> to vector<4x256xf32>
    %c0_3 = arith.constant 0 : index
    %c0_4 = arith.constant 0 : index
    %5 = vector.load %arg8[%c0_3, %c0_4] : memref<8x256xf32, #tpu.memory_space<vmem>>, vector<4x256xf32>
    tpu.vector_store %arg8[%c0_3, %c0_4], %4 {strides = array<i32>} : memref<8x256xf32, #tpu.memory_space<vmem>>, vector<4x256xf32>,
    %c0_5 = arith.constant 0 : index
    %c0_6 = arith.constant 0 : index
    %6 = vector.load %arg8[%c0_5, %c0_6] : memref<8x256xf32, #tpu.memory_space<vmem>>, vector<8x256xf32>
    %c17_i32 = arith.constant 17 : i32
    %7 = tpu.dynamic_rotate %6 by %c17_i32 dim 1 : vector<8x256xf32>, i32 -> vector<8x256xf32>
    %c0_7 = arith.constant 0 : index
    %c0_8 = arith.constant 0 : index
    %8 = vector.load %arg6[%c0_7, %c0_8] : memref<9x256xf32, #tpu.memory_space<vmem>>, vector<1x256xf32>
    %9 = vector.broadcast %8 : vector<1x256xf32> to vector<8x256xf32>
    %10 = arith.mulf %7, %9 : vector<8x256xf32>
    %c16_i32 = arith.constant 16 : i32
    %11 = tpu.dynamic_rotate %6 by %c16_i32 dim 1 : vector<8x256xf32>, i32 -> vector<8x256xf32>
    %c1 = arith.constant 1 : index
    %c0_9 = arith.constant 0 : index
    %12 = vector.load %arg6[%c1, %c0_9] : memref<9x256xf32, #tpu.memory_space<vmem>>, vector<1x256xf32>
    %13 = vector.broadcast %12 : vector<1x256xf32> to vector<8x256xf32>
    %14 = arith.mulf %11, %13 : vector<8x256xf32>
    %c15_i32 = arith.constant 15 : i32
    %15 = tpu.dynamic_rotate %6 by %c15_i32 dim 1 : vector<8x256xf32>, i32 -> vector<8x256xf32>
    %c2 = arith.constant 2 : index
    %c0_10 = arith.constant 0 : index
    %16 = vector.load %arg6[%c2, %c0_10] : memref<9x256xf32, #tpu.memory_space<vmem>>, vector<1x256xf32>
    %17 = vector.broadcast %16 : vector<1x256xf32> to vector<8x256xf32>
    %18 = arith.mulf %15, %17 : vector<8x256xf32>
    %c1_i32 = arith.constant 1 : i32
    %19 = tpu.dynamic_rotate %6 by %c1_i32 dim 1 : vector<8x256xf32>, i32 -> vector<8x256xf32>
    %c3 = arith.constant 3 : index
    %c0_11 = arith.constant 0 : index
    %20 = vector.load %arg6[%c3, %c0_11] : memref<9x256xf32, #tpu.memory_space<vmem>>, vector<1x256xf32>
    %21 = vector.broadcast %20 : vector<1x256xf32> to vector<8x256xf32>
    %22 = arith.mulf %19, %21 : vector<8x256xf32>
    %c255_i32 = arith.constant 255 : i32
    %23 = tpu.dynamic_rotate %6 by %c255_i32 dim 1 : vector<8x256xf32>, i32 -> vector<8x256xf32>
    %c5 = arith.constant 5 : index
    %c0_12 = arith.constant 0 : index
    %24 = vector.load %arg6[%c5, %c0_12] : memref<9x256xf32, #tpu.memory_space<vmem>>, vector<1x256xf32>
    %25 = vector.broadcast %24 : vector<1x256xf32> to vector<8x256xf32>
    %26 = arith.mulf %23, %25 : vector<8x256xf32>
    %c241_i32 = arith.constant 241 : i32
    %27 = tpu.dynamic_rotate %6 by %c241_i32 dim 1 : vector<8x256xf32>, i32 -> vector<8x256xf32>
    %c6 = arith.constant 6 : index
    %c0_13 = arith.constant 0 : index
    %28 = vector.load %arg6[%c6, %c0_13] : memref<9x256xf32, #tpu.memory_space<vmem>>, vector<1x256xf32>
    %29 = vector.broadcast %28 : vector<1x256xf32> to vector<8x256xf32>
    %30 = arith.mulf %27, %29 : vector<8x256xf32>
    %c240_i32 = arith.constant 240 : i32
    %31 = tpu.dynamic_rotate %6 by %c240_i32 dim 1 : vector<8x256xf32>, i32 -> vector<8x256xf32>
    %c7 = arith.constant 7 : index
    %c0_14 = arith.constant 0 : index
    %32 = vector.load %arg6[%c7, %c0_14] : memref<9x256xf32, #tpu.memory_space<vmem>>, vector<1x256xf32>
    %33 = vector.broadcast %32 : vector<1x256xf32> to vector<8x256xf32>
    %34 = arith.mulf %31, %33 : vector<8x256xf32>
    %c239_i32 = arith.constant 239 : i32
    %35 = tpu.dynamic_rotate %6 by %c239_i32 dim 1 : vector<8x256xf32>, i32 -> vector<8x256xf32>
    %c8 = arith.constant 8 : index
    %c0_15 = arith.constant 0 : index
    %36 = vector.load %arg6[%c8, %c0_15] : memref<9x256xf32, #tpu.memory_space<vmem>>, vector<1x256xf32>
    %37 = vector.broadcast %36 : vector<1x256xf32> to vector<8x256xf32>
    %38 = arith.mulf %35, %37 : vector<8x256xf32>
    %39 = tpu.concatenate %10, %14, %18, %22, %6, %26, %30, %34, %38 in 0 : vector<8x256xf32>, vector<8x256xf32>, vector<8x256xf32>, vector<8x256xf32>, vector<8x256xf32>, vector<8x256xf32>, vector<8x256xf32>, vector<8x256xf32>, vector<8x256xf32> -> vector<72x256xf32>
    %40 = arith.truncf %39 : vector<72x256xf32> to vector<72x256xbf16>
    %c0_16 = arith.constant 0 : index
    %c0_17 = arith.constant 0 : index
    %41 = vector.load %arg2[%c0_16, %c0_17] : memref<8x72xbf16, #tpu.memory_space<vmem>>, vector<8x72xbf16>
    %cst_18 = arith.constant dense<0.000000e+00> : vector<8x256xf32>
    %42 = tpu.matmul %41, %40, %cst_18 {dimension_numbers = #tpu.dot_dimension_numbers<[1], [0], [0], [1], [0, 0, 1, 1], [], []>} : vector<8x72xbf16>, vector<72x256xbf16>, vector<8x256xf32> -> vector<8x256xf32>
    %c0_19 = arith.constant 0 : index
    %c0_20 = arith.constant 0 : index
    %43 = vector.load %arg3[%c0_19, %c0_20] : memref<8x1xf32, #tpu.memory_space<vmem>>, vector<8x1xf32>
    %44 = vector.broadcast %43 : vector<8x1xf32> to vector<8x256xf32>
    %45 = arith.addf %42, %44 : vector<8x256xf32>
    %cst_21 = arith.constant 0.000000e+00 : f32
    %46 = vector.broadcast %cst_21 : f32 to vector<8x256xf32>
    %47 = arith.maximumf %45, %46 : vector<8x256xf32>
    %c17_i32_22 = arith.constant 17 : i32
    %48 = tpu.dynamic_rotate %47 by %c17_i32_22 dim 1 : vector<8x256xf32>, i32 -> vector<8x256xf32>
    %c0_23 = arith.constant 0 : index
    %c0_24 = arith.constant 0 : index
    %49 = vector.load %arg6[%c0_23, %c0_24] : memref<9x256xf32, #tpu.memory_space<vmem>>, vector<1x256xf32>
    %50 = vector.broadcast %49 : vector<1x256xf32> to vector<8x256xf32>
    %51 = arith.mulf %48, %50 : vector<8x256xf32>
    %c16_i32_25 = arith.constant 16 : i32
    %52 = tpu.dynamic_rotate %47 by %c16_i32_25 dim 1 : vector<8x256xf32>, i32 -> vector<8x256xf32>
    %c1_26 = arith.constant 1 : index
    %c0_27 = arith.constant 0 : index
    %53 = vector.load %arg6[%c1_26, %c0_27] : memref<9x256xf32, #tpu.memory_space<vmem>>, vector<1x256xf32>
    %54 = vector.broadcast %53 : vector<1x256xf32> to vector<8x256xf32>
    %55 = arith.mulf %52, %54 : vector<8x256xf32>
    %c15_i32_28 = arith.constant 15 : i32
    %56 = tpu.dynamic_rotate %47 by %c15_i32_28 dim 1 : vector<8x256xf32>, i32 -> vector<8x256xf32>
    %c2_29 = arith.constant 2 : index
    %c0_30 = arith.constant 0 : index
    %57 = vector.load %arg6[%c2_29, %c0_30] : memref<9x256xf32, #tpu.memory_space<vmem>>, vector<1x256xf32>
    %58 = vector.broadcast %57 : vector<1x256xf32> to vector<8x256xf32>
    %59 = arith.mulf %56, %58 : vector<8x256xf32>
    %c1_i32_31 = arith.constant 1 : i32
    %60 = tpu.dynamic_rotate %47 by %c1_i32_31 dim 1 : vector<8x256xf32>, i32 -> vector<8x256xf32>
    %c3_32 = arith.constant 3 : index
    %c0_33 = arith.constant 0 : index
    %61 = vector.load %arg6[%c3_32, %c0_33] : memref<9x256xf32, #tpu.memory_space<vmem>>, vector<1x256xf32>
    %62 = vector.broadcast %61 : vector<1x256xf32> to vector<8x256xf32>
    %63 = arith.mulf %60, %62 : vector<8x256xf32>
    %c255_i32_34 = arith.constant 255 : i32
    %64 = tpu.dynamic_rotate %47 by %c255_i32_34 dim 1 : vector<8x256xf32>, i32 -> vector<8x256xf32>
    %c5_35 = arith.constant 5 : index
    %c0_36 = arith.constant 0 : index
    %65 = vector.load %arg6[%c5_35, %c0_36] : memref<9x256xf32, #tpu.memory_space<vmem>>, vector<1x256xf32>
    %66 = vector.broadcast %65 : vector<1x256xf32> to vector<8x256xf32>
    %67 = arith.mulf %64, %66 : vector<8x256xf32>
    %c241_i32_37 = arith.constant 241 : i32
    %68 = tpu.dynamic_rotate %47 by %c241_i32_37 dim 1 : vector<8x256xf32>, i32 -> vector<8x256xf32>
    %c6_38 = arith.constant 6 : index
    %c0_39 = arith.constant 0 : index
    %69 = vector.load %arg6[%c6_38, %c0_39] : memref<9x256xf32, #tpu.memory_space<vmem>>, vector<1x256xf32>
    %70 = vector.broadcast %69 : vector<1x256xf32> to vector<8x256xf32>
    %71 = arith.mulf %68, %70 : vector<8x256xf32>
    %c240_i32_40 = arith.constant 240 : i32
    %72 = tpu.dynamic_rotate %47 by %c240_i32_40 dim 1 : vector<8x256xf32>, i32 -> vector<8x256xf32>
    %c7_41 = arith.constant 7 : index
    %c0_42 = arith.constant 0 : index
    %73 = vector.load %arg6[%c7_41, %c0_42] : memref<9x256xf32, #tpu.memory_space<vmem>>, vector<1x256xf32>
    %74 = vector.broadcast %73 : vector<1x256xf32> to vector<8x256xf32>
    %75 = arith.mulf %72, %74 : vector<8x256xf32>
    %c239_i32_43 = arith.constant 239 : i32
    %76 = tpu.dynamic_rotate %47 by %c239_i32_43 dim 1 : vector<8x256xf32>, i32 -> vector<8x256xf32>
    %c8_44 = arith.constant 8 : index
    %c0_45 = arith.constant 0 : index
    %77 = vector.load %arg6[%c8_44, %c0_45] : memref<9x256xf32, #tpu.memory_space<vmem>>, vector<1x256xf32>
    %78 = vector.broadcast %77 : vector<1x256xf32> to vector<8x256xf32>
    %79 = arith.mulf %76, %78 : vector<8x256xf32>
    %80 = tpu.concatenate %51, %55, %59, %63, %47, %67, %71, %75, %79 in 0 : vector<8x256xf32>, vector<8x256xf32>, vector<8x256xf32>, vector<8x256xf32>, vector<8x256xf32>, vector<8x256xf32>, vector<8x256xf32>, vector<8x256xf32>, vector<8x256xf32> -> vector<72x256xf32>
    %81 = arith.truncf %80 : vector<72x256xf32> to vector<72x256xbf16>
    %c0_46 = arith.constant 0 : index
    %c0_47 = arith.constant 0 : index
    %82 = vector.load %arg4[%c0_46, %c0_47] : memref<8x72xbf16, #tpu.memory_space<vmem>>, vector<8x72xbf16>
    %cst_48 = arith.constant dense<0.000000e+00> : vector<8x256xf32>
    %83 = tpu.matmul %82, %81, %cst_48 {dimension_numbers = #tpu.dot_dimension_numbers<[1], [0], [0], [1], [0, 0, 1, 1], [], []>} : vector<8x72xbf16>, vector<72x256xbf16>, vector<8x256xf32> -> vector<8x256xf32>
    %c0_49 = arith.constant 0 : index
    %c0_50 = arith.constant 0 : index
    %84 = vector.load %arg5[%c0_49, %c0_50] : memref<8x1xf32, #tpu.memory_space<vmem>>, vector<8x1xf32>
    %85 = vector.broadcast %84 : vector<8x1xf32> to vector<8x256xf32>
    %86 = arith.addf %83, %85 : vector<8x256xf32>
    %cst_51 = arith.constant 0.000000e+00 : f32
    %87 = vector.broadcast %cst_51 : f32 to vector<8x256xf32>
    %88 = arith.maximumf %86, %87 : vector<8x256xf32>
    %c0_52 = arith.constant 0 : index
    %c0_53 = arith.constant 0 : index
    %c0_54 = arith.constant 0 : index
    %89 = vector.load %arg7[%c0_52, %c0_53, %c0_54] : memref<1x8x256xf32, #tpu.memory_space<vmem>>, vector<1x8x256xf32>
    %90 = vector.shape_cast %89 : vector<1x8x256xf32> to vector<8x256xf32>
    %91 = vector.shape_cast %88 : vector<8x256xf32> to vector<1x8x256xf32>
    tpu.vector_store %arg7[%c0_52, %c0_53, %c0_54], %91 {strides = array<i32>} : memref<1x8x256xf32, #tpu.memory_space<vmem>>, vector<1x8x256xf32>,
    return
  }
  func.func @transform_0(%arg0: i32) -> (i32, i32, i32) {
    %c0_i32 = arith.constant 0 : i32
    %c0_i32_0 = arith.constant 0 : i32
    %c0_i32_1 = arith.constant 0 : i32
    return %arg0, %c0_i32, %c0_i32_0 : i32, i32, i32
  }
  func.func @transform_1(%arg0: i32) -> (i32, i32) {
    %c0_i32 = arith.constant 0 : i32
    %c0_i32_0 = arith.constant 0 : i32
    %c0_i32_1 = arith.constant 0 : i32
    return %c0_i32, %c0_i32_0 : i32, i32
  }
  func.func @transform_2(%arg0: i32) -> (i32, i32) {
    %c0_i32 = arith.constant 0 : i32
    %c0_i32_0 = arith.constant 0 : i32
    %c0_i32_1 = arith.constant 0 : i32
    return %c0_i32, %c0_i32_0 : i32, i32
  }
  func.func @transform_3(%arg0: i32) -> (i32, i32) {
    %c0_i32 = arith.constant 0 : i32
    %c0_i32_0 = arith.constant 0 : i32
    %c0_i32_1 = arith.constant 0 : i32
    return %c0_i32, %c0_i32_0 : i32, i32
  }
  func.func @transform_4(%arg0: i32) -> (i32, i32) {
    %c0_i32 = arith.constant 0 : i32
    %c0_i32_0 = arith.constant 0 : i32
    %c0_i32_1 = arith.constant 0 : i32
    return %c0_i32, %c0_i32_0 : i32, i32
  }
  func.func @transform_5(%arg0: i32) -> (i32, i32) {
    %c0_i32 = arith.constant 0 : i32
    %c0_i32_0 = arith.constant 0 : i32
    %c0_i32_1 = arith.constant 0 : i32
    return %c0_i32, %c0_i32_0 : i32, i32
  }
  func.func @transform_6(%arg0: i32) -> (i32, i32, i32) {
    %c0_i32 = arith.constant 0 : i32
    %c0_i32_0 = arith.constant 0 : i32
    %c0_i32_1 = arith.constant 0 : i32
    return %arg0, %c0_i32, %c0_i32_0 : i32, i32, i32
  }
}

</mosaic_0001>

<llo_original>
// kernel: input_forward_nchw.1
$region0: #{input_forward_nchw.1}
  #allocation0 [shape = 'u32[]', space=smem, size = 0x4, offset = 0x4, fixed_abs, tag = 'smem constant byte address 0x4 - core index']
  #allocation1 [shape = 'u32[144,128]{1,0:T(1,128)}', space=vmem, size = 0x12000, scoped, tag = 'internal scratch']
  #allocation2 [shape = 'f32[8,256]{1,0:T(8,128)}', space=vmem, size = 0x2000, scoped, tag = 'scratch operand']
  %s0 = inlined_call_operand.vmem [shape: bf16[2,4,256], index: 0, kind: input, shape index: {}]
  %s1 = inlined_call_operand.vmem [shape: bf16[8,72], index: 1, kind: input, shape index: {}]
  %s2 = inlined_call_operand.vmem [shape: f32[8,1], index: 2, kind: input, shape index: {}]
  %s3 = inlined_call_operand.vmem [shape: bf16[8,72], index: 3, kind: input, shape index: {}]
  %s4 = inlined_call_operand.vmem [shape: f32[8,1], index: 4, kind: input, shape index: {}]
  %s5 = inlined_call_operand.vmem [shape: f32[9,256], index: 5, kind: input, shape index: {}]
  %s6 = inlined_call_operand.vmem [shape: f32[2,8,256], index: 6, kind: output, shape index: {}]
  %s7 = sld [smem:[#allocation0]]
  $region57: #{input_forward_nchw.1} parent=0
    _
  %s9 = ssub.s32 1, %s7
  %s10 = scalar_select 0, %s9, %s7
  loop: start=0, step=1, limit=4
  $region2: #{input_forward_nchw.1} parent=0 // loop_pre_header
    _
  $region3: #{input_forward_nchw.1} parent=0 // loop_header
    %s12 = sphi 0, %s16
    %p13 = scmp.ge.s32.totalorder %s12, 4
    %s22 = sphi 0, %s24
    %s25 = sphi 0, %s22
    %s26 = sphi 0, %s25
    %s42 = sphi 0, %s26
    %s46 = sphi 0, %s46
    %s48 = sphi 0, %s46
    %s49 = sphi 0, %s48
    %s63 = sphi 0, %s49
    %s67 = sphi 0, %s67
    %s69 = sphi 0, %s67
    %s70 = sphi 0, %s69
    %s84 = sphi 0, %s70
    %s88 = sphi 0, %s88
    %s90 = sphi 0, %s88
    %s91 = sphi 0, %s90
    %s105 = sphi 0, %s91
    %s109 = sphi 0, %s109
    %s111 = sphi 0, %s109
    %s112 = sphi 0, %s111
    %s126 = sphi 0, %s112
    %s130 = sphi 0, %s130
    %s132 = sphi 0, %s130
    %s133 = sphi 0, %s132
    %s147 = sphi 0, %s133
    %s153 = sphi 0, %s155
    %s156 = sphi 0, %s153
    %s157 = sphi 0, %s156
    %s173 = sphi 0, %s157
  $region4: #{input_forward_nchw.1} parent=0 // loop_header_branch
    %15 = sbr.rel (%p13) target = $region8
  $region5: #{input_forward_nchw.1} parent=0 // loop_body
    %s17 = ssub.s32 %s12, 1
    %s18 = ssub.s32 %s12, 2
    %s19 = sadd.s32 %s12, 1
    %s20 = ssub.s32 %s12, %s19
    %p21 = scmp.eq.s32.totalorder %s20, 0
    %s23 = sadd.s32 %s22, 1
    %s24 = scalar_select %p21, %s22, %s23
    %p27 = pneg %p21
    %p28 = scmp.eq.s32.totalorder %s12, 1
    %p29 = por %p27, %p28
    %p30 = scmp.ne.s32.totalorder %s22, %s25
    %p31 = scmp.eq.s32.totalorder %s12, 0
    %p32 = por %p30, %p31
    %p33 = scmp.ne.s32.totalorder %s22, %s25
    %p34 = scmp.eq.s32.totalorder %s17, 1
    %p35 = por %p33, %p34
    %p36 = scmp.ne.s32.totalorder %s25, %s26
    %p37 = scmp.eq.s32.totalorder %s17, 0
    %p38 = por %p36, %p37
    %p39 = scmp.ne.s32.totalorder %s25, %s26
    %p40 = scmp.eq.s32.totalorder %s18, 1
    %p41 = por %p39, %p40
    %p43 = scmp.ne.s32.totalorder %s26, %s42
    %p44 = scmp.eq.s32.totalorder %s18, 0
    %p45 = por %p43, %p44
    %s47 = sadd.s32 %s46, 1
    %p50 = scmp.eq.s32.totalorder %s12, 1
    %p51 = scmp.ne.s32.totalorder %s46, %s48
    %p52 = scmp.eq.s32.totalorder %s12, 0
    %p53 = por %p51, %p52
    %p54 = scmp.ne.s32.totalorder %s46, %s48
    %p55 = scmp.eq.s32.totalorder %s17, 1
    %p56 = por %p54, %p55
    %p57 = scmp.ne.s32.totalorder %s48, %s49
    %p58 = scmp.eq.s32.totalorder %s17, 0
    %p59 = por %p57, %p58
    %p60 = scmp.ne.s32.totalorder %s48, %s49
    %p61 = scmp.eq.s32.totalorder %s18, 1
    %p62 = por %p60, %p61
    %p64 = scmp.ne.s32.totalorder %s49, %s63
    %p65 = scmp.eq.s32.totalorder %s18, 0
    %p66 = por %p64, %p65
    %s68 = sadd.s32 %s67, 1
    %p71 = scmp.eq.s32.totalorder %s12, 1
    %p72 = scmp.ne.s32.totalorder %s67, %s69
    %p73 = scmp.eq.s32.totalorder %s12, 0
    %p74 = por %p72, %p73
    %p75 = scmp.ne.s32.totalorder %s67, %s69
    %p76 = scmp.eq.s32.totalorder %s17, 1
    %p77 = por %p75, %p76
    %p78 = scmp.ne.s32.totalorder %s69, %s70
    %p79 = scmp.eq.s32.totalorder %s17, 0
    %p80 = por %p78, %p79
    %p81 = scmp.ne.s32.totalorder %s69, %s70
    %p82 = scmp.eq.s32.totalorder %s18, 1
    %p83 = por %p81, %p82
    %p85 = scmp.ne.s32.totalorder %s70, %s84
    %p86 = scmp.eq.s32.totalorder %s18, 0
    %p87 = por %p85, %p86
    %s89 = sadd.s32 %s88, 1
    %p92 = scmp.eq.s32.totalorder %s12, 1
    %p93 = scmp.ne.s32.totalorder %s88, %s90
    %p94 = scmp.eq.s32.totalorder %s12, 0
    %p95 = por %p93, %p94
    %p96 = scmp.ne.s32.totalorder %s88, %s90
    %p97 = scmp.eq.s32.totalorder %s17, 1
    %p98 = por %p96, %p97
    %p99 = scmp.ne.s32.totalorder %s90, %s91
    %p100 = scmp.eq.s32.totalorder %s17, 0
    %p101 = por %p99, %p100
    %p102 = scmp.ne.s32.totalorder %s90, %s91
    %p103 = scmp.eq.s32.totalorder %s18, 1
    %p104 = por %p102, %p103
    %p106 = scmp.ne.s32.totalorder %s91, %s105
    %p107 = scmp.eq.s32.totalorder %s18, 0
    %p108 = por %p106, %p107
    %s110 = sadd.s32 %s109, 1
    %p113 = scmp.eq.s32.totalorder %s12, 1
    %p114 = scmp.ne.s32.totalorder %s109, %s111
    %p115 = scmp.eq.s32.totalorder %s12, 0
    %p116 = por %p114, %p115
    %p117 = scmp.ne.s32.totalorder %s109, %s111
    %p118 = scmp.eq.s32.totalorder %s17, 1
    %p119 = por %p117, %p118
    %p120 = scmp.ne.s32.totalorder %s111, %s112
    %p121 = scmp.eq.s32.totalorder %s17, 0
    %p122 = por %p120, %p121
    %p123 = scmp.ne.s32.totalorder %s111, %s112
    %p124 = scmp.eq.s32.totalorder %s18, 1
    %p125 = por %p123, %p124
    %p127 = scmp.ne.s32.totalorder %s112, %s126
    %p128 = scmp.eq.s32.totalorder %s18, 0
    %p129 = por %p127, %p128
    %s131 = sadd.s32 %s130, 1
    %p134 = scmp.eq.s32.totalorder %s12, 1
    %p135 = scmp.ne.s32.totalorder %s130, %s132
    %p136 = scmp.eq.s32.totalorder %s12, 0
    %p137 = por %p135, %p136
    %p138 = scmp.ne.s32.totalorder %s130, %s132
    %p139 = scmp.eq.s32.totalorder %s17, 1
    %p140 = por %p138, %p139
    %p141 = scmp.ne.s32.totalorder %s132, %s133
    %p142 = scmp.eq.s32.totalorder %s17, 0
    %p143 = por %p141, %p142
    %p144 = scmp.ne.s32.totalorder %s132, %s133
    %p145 = scmp.eq.s32.totalorder %s18, 1
    %p146 = por %p144, %p145
    %p148 = scmp.ne.s32.totalorder %s133, %s147
    %p149 = scmp.eq.s32.totalorder %s18, 0
    %p150 = por %p148, %p149
    %s151 = ssub.s32 %s12, %s19
    %p152 = scmp.eq.s32.totalorder %s151, 0
    %s154 = sadd.s32 %s153, 1
    %s155 = scalar_select %p152, %s153, %s154
    %p158 = pneg %p152
    %p159 = scmp.eq.s32.totalorder %s12, 1
    %p160 = por %p158, %p159
    %p161 = scmp.ne.s32.totalorder %s153, %s156
    %p162 = scmp.eq.s32.totalorder %s12, 0
    %p163 = por %p161, %p162
    %p164 = scmp.ne.s32.totalorder %s153, %s156
    %p165 = scmp.eq.s32.totalorder %s17, 1
    %p166 = por %p164, %p165
    %p167 = scmp.ne.s32.totalorder %s156, %s157
    %p168 = scmp.eq.s32.totalorder %s17, 0
    %p169 = por %p167, %p168
    %p170 = scmp.ne.s32.totalorder %s156, %s157
    %p171 = scmp.eq.s32.totalorder %s18, 1
    %p172 = por %p170, %p171
    %p174 = scmp.ne.s32.totalorder %s157, %s173
    %p175 = scmp.eq.s32.totalorder %s18, 0
    %p176 = por %p174, %p175
    %p177 = scmp.le.s32.totalorder 1, %s12
    %p178 = scmp.lt.s32.totalorder %s12, 3
    %p179 = pnand %p177, %p178
    %p180 = pneg %p179
    // Predicated region
    $region9: #{input_forward_nchw.1} parent=5 // pred_check
      _
    $region10: #{input_forward_nchw.1} parent=5 // pred_check_branch
      %182 = sbr.rel (%p179) target = $region12
    $region11: #{input_forward_nchw.1} parent=5 // pred_region
      %s183 = ssub.s32 %s12, 1
      // Predicated region
      $region13: #{input_forward_nchw.1} parent=11 // pred_check
        %p184 = pneg %p59
      $region14: #{input_forward_nchw.1} parent=11 // pred_check_branch
        %186 = sbr.rel (%p184) target = $region16
      $region15: #{input_forward_nchw.1} parent=11 // pred_region
        _
      $region16: #{input_forward_nchw.1} parent=11 // pred_fallthru
        _
      // Predicated region
      $region17: #{input_forward_nchw.1} parent=11 // pred_check
        %p187 = pneg %p80
      $region18: #{input_forward_nchw.1} parent=11 // pred_check_branch
        %189 = sbr.rel (%p187) target = $region20
      $region19: #{input_forward_nchw.1} parent=11 // pred_region
        _
      $region20: #{input_forward_nchw.1} parent=11 // pred_fallthru
        _
      // Predicated region
      $region21: #{input_forward_nchw.1} parent=11 // pred_check
        %p190 = pneg %p101
      $region22: #{input_forward_nchw.1} parent=11 // pred_check_branch
        %192 = sbr.rel (%p190) target = $region24
      $region23: #{input_forward_nchw.1} parent=11 // pred_region
        _
      $region24: #{input_forward_nchw.1} parent=11 // pred_fallthru
        _
      // Predicated region
      $region25: #{input_forward_nchw.1} parent=11 // pred_check
        %p193 = pneg %p122
      $region26: #{input_forward_nchw.1} parent=11 // pred_check_branch
        %195 = sbr.rel (%p193) target = $region28
      $region27: #{input_forward_nchw.1} parent=11 // pred_region
        _
      $region28: #{input_forward_nchw.1} parent=11 // pred_fallthru
        _
      // Predicated region
      $region29: #{input_forward_nchw.1} parent=11 // pred_check
        %p196 = pneg %p143
      $region30: #{input_forward_nchw.1} parent=11 // pred_check_branch
        %198 = sbr.rel (%p196) target = $region32
      $region31: #{input_forward_nchw.1} parent=11 // pred_region
        _
      $region32: #{input_forward_nchw.1} parent=11 // pred_fallthru
        _
    $region12: #{input_forward_nchw.1} parent=5 // pred_fallthru
      _
    %p199 = scmp.lt.s32.totalorder %s12, 2
    // Predicated region
    $region33: #{input_forward_nchw.1} parent=5 // pred_check
      %p200 = pneg %p199
    $region34: #{input_forward_nchw.1} parent=5 // pred_check_branch
      %202 = sbr.rel (%p200) target = $region36
    $region35: #{input_forward_nchw.1} parent=5 // pred_region
      // Predicated region
      $region37: #{input_forward_nchw.1} parent=35 // pred_check
        %p203 = pneg %p32
      $region38: #{input_forward_nchw.1} parent=35 // pred_check_branch
        %205 = sbr.rel (%p203) target = $region40
      $region39: #{input_forward_nchw.1} parent=35 // pred_region
        %p206 = scmp.lt.s32.totalorder %s12, 1
        %s207 = scalar_select %p206, %s12, 1
        %s208 = smul.addr %s207, 2
        %s209 = smul.addr %s208, 2
        %s210 = scalar_lea.vmem %s0, %s209
      $region40: #{input_forward_nchw.1} parent=35 // pred_fallthru
        _
    $region36: #{input_forward_nchw.1} parent=5 // pred_fallthru
      _
    %p211 = scmp.le.s32.totalorder 1, %s12
    %p212 = scmp.lt.s32.totalorder %s12, 3
    %p213 = pnand %p211, %p212
    %p214 = pneg %p213
    // Predicated region
    $region41: #{input_forward_nchw.1} parent=5 // pred_check
      _
    $region42: #{input_forward_nchw.1} parent=5 // pred_check_branch
      %216 = sbr.rel (%p213) target = $region44
    $region43: #{input_forward_nchw.1} parent=5 // pred_region
      %s217 = ssub.s32 %s12, 1
      %p218 = scmp.lt.s32.totalorder %s17, 1
      %s219 = scalar_select %p218, %s17, 1
      %s220 = smul.addr %s219, 2
      %s221 = smul.addr %s220, 2
      %s222 = scalar_lea.vmem %s0, %s221
      %p223 = pneg %p38
      %p224 = pneg %p35
      %p225 = pneg %p59
      %p226 = pneg %p56
      %p227 = pneg %p80
      %p228 = pneg %p77
      %p229 = pneg %p101
      %p230 = pneg %p98
      %p231 = pneg %p122
      %p232 = pneg %p119
      %p233 = pneg %p143
      %p234 = pneg %p140
      %p235 = pneg %p169
      %p236 = pneg %p166
      %p237 = scmp.lt.s32.totalorder %s17, 1
      %s238 = scalar_select %p237, %s17, 1
      %s239 = smul.addr %s238, 2
      %s240 = smul.addr %s239, 8
      %s241 = scalar_lea.vmem %s6, %s240
      %p242 = scmp.lt.s32.totalorder %s17, 1
      %s243 = scalar_select %p242, %s17, 1
      %s244 = smul.addr %s243, 2
      %s245 = smul.addr %s244, 2
      %s246 = scalar_lea.vmem %s0, %s245
      %p247 = scmp.lt.s32.totalorder %s17, 1
      %s248 = scalar_select %p247, %s17, 1
      %s249 = smul.addr %s248, 2
      %s250 = smul.addr %s249, 8
      %s251 = scalar_lea.vmem %s6, %s250
      %253 = vst [vmem:[#allocation2] sm:$0xf0] 0.0
      %254 = vst [vmem:[#allocation2 + $0x8] sm:$0xf0] 0.0
      %v255 = vld [vmem:[%s246] sm:$0xf]
      %v256 = vunpack.c.l.bf16 %v255
      %v258 = vcombine.high %v256, %v256
      %260 = vst [vmem:[#allocation2] sm:$0xf] %v256
      %261 = vst [vmem:[#allocation2 + $0x8] sm:$0xf] %v258
      %v262 = vld [vmem:[#allocation2] sm:$0xff]
      %v263 = vld [vmem:[#allocation2 + $0x8] sm:$0xff]
      %264 = vrot.lane.b32.xlu0 %v262, 17
      %v265 = vpop.permute.xlu0 %264
      %266 = vrot.lane.b32.xlu0 %v263, 17
      %v267 = vpop.permute.xlu0 %266
      %v268 = vlaneseq
      %v269 = vand.u32 %v268, 127
      %vm270 = vcmp.lt.s32.totalorder %v269, 17
      %v271 = vsel %vm270, %v265, %v267
      %v272 = vsel %vm270, %v267, %v265
      %v273 = vld [vmem:[%s5] ss:$8 sm:$0x3]
      %v275 = vlaneseq
      %v276 = vshrl.u32 %v275, 7
      %v277 = vsub.s32 0, %v276
      %v278 = vrot.slane %v273, %v277
      %v279 = vlaneseq
      %v280 = vshrl.u32 %v279, 7
      %v281 = vsub.s32 1, %v280
      %v282 = vrot.slane %v273, %v281
      %v285 = vmul.f32 %v272, %v278
      %v286 = vmul.f32 %v271, %v282
      %287 = vrot.lane.b32.xlu0 %v262, 16
      %v288 = vpop.permute.xlu0 %287
      %289 = vrot.lane.b32.xlu0 %v263, 16
      %v290 = vpop.permute.xlu0 %289
      %vm291 = vcmp.lt.s32.totalorder %v269, 16
      %v292 = vsel %vm291, %v288, %v290
      %v293 = vsel %vm291, %v290, %v288
      %s294 = scalar_lea.vmem %s5, 1
      %v295 = vld [vmem:[%s294] ss:$8 sm:$0x3]
      %v297 = vlaneseq
      %v298 = vshrl.u32 %v297, 7
      %v299 = vsub.s32 0, %v298
      %v300 = vrot.slane %v295, %v299
      %v301 = vlaneseq
      %v302 = vshrl.u32 %v301, 7
      %v303 = vsub.s32 1, %v302
      %v304 = vrot.slane %v295, %v303
      %v307 = vmul.f32 %v293, %v300
      %v308 = vmul.f32 %v292, %v304
      %309 = vrot.lane.b32.xlu0 %v262, 15
      %v310 = vpop.permute.xlu0 %309
      %311 = vrot.lane.b32.xlu0 %v263, 15
      %v312 = vpop.permute.xlu0 %311
      %vm313 = vcmp.lt.s32.totalorder %v269, 15
      %v314 = vsel %vm313, %v310, %v312
      %v315 = vsel %vm313, %v312, %v310
      %s316 = scalar_lea.vmem %s5, 2
      %v317 = vld [vmem:[%s316] ss:$8 sm:$0x3]
      %v319 = vlaneseq
      %v320 = vshrl.u32 %v319, 7
      %v321 = vsub.s32 0, %v320
      %v322 = vrot.slane %v317, %v321
      %v323 = vlaneseq
      %v324 = vshrl.u32 %v323, 7
      %v325 = vsub.s32 1, %v324
      %v326 = vrot.slane %v317, %v325
      %v329 = vmul.f32 %v315, %v322
      %v330 = vmul.f32 %v314, %v326
      %331 = vrot.lane.b32.xlu0 %v262, 1
      %v332 = vpop.permute.xlu0 %331
      %333 = vrot.lane.b32.xlu0 %v263, 1
      %v334 = vpop.permute.xlu0 %333
      %vm335 = vcmp.lt.s32.totalorder %v269, 1
      %v336 = vsel %vm335, %v332, %v334
      %v337 = vsel %vm335, %v334, %v332
      %s338 = scalar_lea.vmem %s5, 3
      %v339 = vld [vmem:[%s338] ss:$8 sm:$0x3]
      %v341 = vlaneseq
      %v342 = vshrl.u32 %v341, 7
      %v343 = vsub.s32 0, %v342
      %v344 = vrot.slane %v339, %v343
      %v345 = vlaneseq
      %v346 = vshrl.u32 %v345, 7
      %v347 = vsub.s32 1, %v346
      %v348 = vrot.slane %v339, %v347
      %v351 = vmul.f32 %v337, %v344
      %v352 = vmul.f32 %v336, %v348
      %353 = vrot.lane.b32.xlu0 %v262, 127
      %v354 = vpop.permute.xlu0 %353
      %355 = vrot.lane.b32.xlu0 %v263, 127
      %v356 = vpop.permute.xlu0 %355
      %vm357 = vcmp.lt.s32.totalorder %v269, 127
      %v358 = vsel %vm357, %v354, %v356
      %v359 = vsel %vm357, %v356, %v354
      %s360 = scalar_lea.vmem %s5, 5
      %v361 = vld [vmem:[%s360] ss:$8 sm:$0x3]
      %v363 = vlaneseq
      %v364 = vshrl.u32 %v363, 7
      %v365 = vsub.s32 0, %v364
      %v366 = vrot.slane %v361, %v365
      %v367 = vlaneseq
      %v368 = vshrl.u32 %v367, 7
      %v369 = vsub.s32 1, %v368
      %v370 = vrot.slane %v361, %v369
      %v373 = vmul.f32 %v358, %v366
      %v374 = vmul.f32 %v359, %v370
      %375 = vrot.lane.b32.xlu0 %v262, 113
      %v376 = vpop.permute.xlu0 %375
      %377 = vrot.lane.b32.xlu0 %v263, 113
      %v378 = vpop.permute.xlu0 %377
      %vm379 = vcmp.lt.s32.totalorder %v269, 113
      %v380 = vsel %vm379, %v376, %v378
      %v381 = vsel %vm379, %v378, %v376
      %s382 = scalar_lea.vmem %s5, 6
      %v383 = vld [vmem:[%s382] ss:$8 sm:$0x3]
      %v385 = vlaneseq
      %v386 = vshrl.u32 %v385, 7
      %v387 = vsub.s32 0, %v386
      %v388 = vrot.slane %v383, %v387
      %v389 = vlaneseq
      %v390 = vshrl.u32 %v389, 7
      %v391 = vsub.s32 1, %v390
      %v392 = vrot.slane %v383, %v391
      %v395 = vmul.f32 %v380, %v388
      %v396 = vmul.f32 %v381, %v392
      %397 = vrot.lane.b32.xlu0 %v262, 112
      %v398 = vpop.permute.xlu0 %397
      %399 = vrot.lane.b32.xlu0 %v263, 112
      %v400 = vpop.permute.xlu0 %399
      %vm401 = vcmp.lt.s32.totalorder %v269, 112
      %v402 = vsel %vm401, %v398, %v400
      %v403 = vsel %vm401, %v400, %v398
      %s404 = scalar_lea.vmem %s5, 7
      %v405 = vld [vmem:[%s404] ss:$8 sm:$0x3]
      %v407 = vlaneseq
      %v408 = vshrl.u32 %v407, 7
      %v409 = vsub.s32 0, %v408
      %v410 = vrot.slane %v405, %v409
      %v411 = vlaneseq
      %v412 = vshrl.u32 %v411, 7
      %v413 = vsub.s32 1, %v412
      %v414 = vrot.slane %v405, %v413
      %v417 = vmul.f32 %v402, %v410
      %v418 = vmul.f32 %v403, %v414
      %419 = vrot.lane.b32.xlu0 %v262, 111
      %v420 = vpop.permute.xlu0 %419
      %421 = vrot.lane.b32.xlu0 %v263, 111
      %v422 = vpop.permute.xlu0 %421
      %vm423 = vcmp.lt.s32.totalorder %v269, 111
      %v424 = vsel %vm423, %v420, %v422
      %v425 = vsel %vm423, %v422, %v420
      %s426 = scalar_lea.vmem %s5, 16
      %v427 = vld [vmem:[%s426] ss:$8 sm:$0x3]
      %v429 = vlaneseq
      %v430 = vshrl.u32 %v429, 7
      %v431 = vsub.s32 0, %v430
      %v432 = vrot.slane %v427, %v431
      %v433 = vlaneseq
      %v434 = vshrl.u32 %v433, 7
      %v435 = vsub.s32 1, %v434
      %v436 = vrot.slane %v427, %v435
      %v439 = vmul.f32 %v424, %v432
      %v440 = vmul.f32 %v425, %v436
      %v441 = vpack.c.bf16 %v307, %v285
      %v442 = vpack.c.bf16 %v308, %v286
      %v443 = vpack.c.bf16 %v351, %v329
      %v444 = vpack.c.bf16 %v352, %v330
      %v445 = vpack.c.bf16 %v373, %v262
      %v446 = vpack.c.bf16 %v374, %v263
      %v447 = vpack.c.bf16 %v417, %v395
      %v448 = vpack.c.bf16 %v418, %v396
      %v449 = vpack.c.bf16 %v439, %v439
      %v450 = vpack.c.bf16 %v440, %v440
      %v451 = vld [vmem:[%s1] sm:$0xf]
      %v452 = vld [vmem:[%s2] sm:$0xff]
      %454 = vset.pattern.permute.xlu0 0
      %455 = vperm.xlu0 %454, %v452
      %v456 = vpop.permute.xlu0 %455
      %vm458 = vcmask 588800
      %v460 = vsel %vm458, %v451, 0
      %vm462 = vcmask 1043456
      %v464 = vsel %vm462, %v449, 0
      %v467 = vsel %vm462, %v450, 0
      %469 = vmatprep.subr.bf16.mxu0 0
      %470 = vmatpush1.bf16.msra.mxu0 0
      %471 = vmatprep.subr.bf16.mxu0 0
      %472 = vmatpush1.bf16.msra.mxu0 0
      %473 = vmatprep.subr.bf16.mxu0 0
      %474 = vmatpush1.bf16.msra.mxu0 0
      %475 = vmatprep.subr.bf16.mxu0 %v467
      %476 = vmatpush1.bf16.msra.mxu0 %v464
      %477 = vmatprep.subr.bf16.mxu0 %v448
      %478 = vmatpush1.bf16.msra.mxu0 %v447
      %479 = vmatprep.subr.bf16.mxu0 %v446
      %480 = vmatpush1.bf16.msra.mxu0 %v445
      %481 = vmatprep.subr.bf16.mxu0 %v444
      %482 = vmatpush1.bf16.msra.mxu0 %v443
      %483 = vmatprep.subr.bf16.mxu0 %v442
      %484 = vmatpush1.bf16.msra.mxu0 %v441
      %485 = vmatprep.subr.bf16.mxu0 0
      %486 = vmatpush2.bf16.msra.mxu0 0
      %487 = vmatprep.subr.bf16.mxu0 0
      %488 = vmatpush2.bf16.msra.mxu0 0
      %489 = vmatprep.subr.bf16.mxu0 0
      %490 = vmatpush2.bf16.msra.mxu0 0
      %491 = vmatprep.subr.bf16.mxu0 0
      %492 = vmatpush2.bf16.msra.mxu0 0
      %493 = vmatprep.subr.bf16.mxu0 0
      %494 = vmatpush2.bf16.msra.mxu0 0
      %495 = vmatprep.subr.bf16.mxu0 0
      %496 = vmatpush2.bf16.msra.mxu0 0
      %497 = vmatprep.subr.bf16.mxu0 0
      %498 = vmatpush2.bf16.msra.mxu0 0
      %499 = vmatprep.subr.bf16.mxu0 0
      %500 = vmatpush2.bf16.msra.mxu0 0
      %501 = vmatprep.mubr.bf16.mxu0 0
      %502 = vmatmul.mubr.bf16.gmra.mxu0 %v460
      %v503 = vpop.f32.mrf.mxu0
      %v504 = vadd.f32 %v456, %v503
      %v505 = vpop.f32.mrf.mxu0
      %v506 = vadd.f32 %v456, %v505
      %v507 = vpop.f32.mrf.mxu0
      %v508 = vpop.f32.mrf.mxu0
      %509 = vdwg.mxu0
      %v510 = vmax.f32 %v504, 0.0
      %v511 = vmax.f32 %v506, 0.0
      %512 = vrot.lane.b32.xlu0 %v510, 17
      %v513 = vpop.permute.xlu0 %512
      %514 = vrot.lane.b32.xlu0 %v511, 17
      %v515 = vpop.permute.xlu0 %514
      %v516 = vsel %vm270, %v513, %v515
      %v517 = vsel %vm270, %v515, %v513
      %v518 = vmul.f32 %v517, %v278
      %v519 = vmul.f32 %v516, %v282
      %520 = vrot.lane.b32.xlu0 %v510, 16
      %v521 = vpop.permute.xlu0 %520
      %522 = vrot.lane.b32.xlu0 %v511, 16
      %v523 = vpop.permute.xlu0 %522
      %v524 = vsel %vm291, %v521, %v523
      %v525 = vsel %vm291, %v523, %v521
      %v526 = vmul.f32 %v525, %v300
      %v527 = vmul.f32 %v524, %v304
      %528 = vrot.lane.b32.xlu0 %v510, 15
      %v529 = vpop.permute.xlu0 %528
      %530 = vrot.lane.b32.xlu0 %v511, 15
      %v531 = vpop.permute.xlu0 %530
      %v532 = vsel %vm313, %v529, %v531
      %v533 = vsel %vm313, %v531, %v529
      %v534 = vmul.f32 %v533, %v322
      %v535 = vmul.f32 %v532, %v326
      %536 = vrot.lane.b32.xlu0 %v510, 1
      %v537 = vpop.permute.xlu0 %536
      %538 = vrot.lane.b32.xlu0 %v511, 1
      %v539 = vpop.permute.xlu0 %538
      %v540 = vsel %vm335, %v537, %v539
      %v541 = vsel %vm335, %v539, %v537
      %v542 = vmul.f32 %v541, %v344
      %v543 = vmul.f32 %v540, %v348
      %544 = vrot.lane.b32.xlu0 %v510, 127
      %v545 = vpop.permute.xlu0 %544
      %546 = vrot.lane.b32.xlu0 %v511, 127
      %v547 = vpop.permute.xlu0 %546
      %v548 = vsel %vm357, %v545, %v547
      %v549 = vsel %vm357, %v547, %v545
      %v550 = vmul.f32 %v548, %v366
      %v551 = vmul.f32 %v549, %v370
      %552 = vrot.lane.b32.xlu0 %v510, 113
      %v553 = vpop.permute.xlu0 %552
      %554 = vrot.lane.b32.xlu0 %v511, 113
      %v555 = vpop.permute.xlu0 %554
      %v556 = vsel %vm379, %v553, %v555
      %v557 = vsel %vm379, %v555, %v553
      %v558 = vmul.f32 %v556, %v388
      %v559 = vmul.f32 %v557, %v392
      %560 = vrot.lane.b32.xlu0 %v510, 112
      %v561 = vpop.permute.xlu0 %560
      %562 = vrot.lane.b32.xlu0 %v511, 112
      %v563 = vpop.permute.xlu0 %562
      %v564 = vsel %vm401, %v561, %v563
      %v565 = vsel %vm401, %v563, %v561
      %v566 = vmul.f32 %v564, %v410
      %v567 = vmul.f32 %v565, %v414
      %568 = vrot.lane.b32.xlu0 %v510, 111
      %v569 = vpop.permute.xlu0 %568
      %570 = vrot.lane.b32.xlu0 %v511, 111
      %v571 = vpop.permute.xlu0 %570
      %v572 = vsel %vm423, %v569, %v571
      %v573 = vsel %vm423, %v571, %v569
      %v574 = vmul.f32 %v572, %v432
      %v575 = vmul.f32 %v573, %v436
      %v576 = vpack.c.bf16 %v526, %v518
      %v577 = vpack.c.bf16 %v527, %v519
      %v578 = vpack.c.bf16 %v542, %v534
      %v579 = vpack.c.bf16 %v543, %v535
      %v580 = vpack.c.bf16 %v550, %v510
      %v581 = vpack.c.bf16 %v551, %v511
      %v582 = vpack.c.bf16 %v566, %v558
      %v583 = vpack.c.bf16 %v567, %v559
      %v584 = vpack.c.bf16 %v574, %v574
      %v585 = vpack.c.bf16 %v575, %v575
      %v586 = vld [vmem:[%s3] sm:$0xf]
      %v587 = vld [vmem:[%s4] sm:$0xff]
      %589 = vset.pattern.permute.xlu0 0
      %590 = vperm.xlu0 %589, %v587
      %v591 = vpop.permute.xlu0 %590
      %v594 = vsel %vm458, %v586, 0
      %v597 = vsel %vm462, %v584, 0
      %v600 = vsel %vm462, %v585, 0
      %602 = vmatprep.subr.bf16.mxu0 0
      %603 = vmatpush1.bf16.msra.mxu0 0
      %604 = vmatprep.subr.bf16.mxu0 0
      %605 = vmatpush1.bf16.msra.mxu0 0
      %606 = vmatprep.subr.bf16.mxu0 0
      %607 = vmatpush1.bf16.msra.mxu0 0
      %608 = vmatprep.subr.bf16.mxu0 %v600
      %609 = vmatpush1.bf16.msra.mxu0 %v597
      %610 = vmatprep.subr.bf16.mxu0 %v583
      %611 = vmatpush1.bf16.msra.mxu0 %v582
      %612 = vmatprep.subr.bf16.mxu0 %v581
      %613 = vmatpush1.bf16.msra.mxu0 %v580
      %614 = vmatprep.subr.bf16.mxu0 %v579
      %615 = vmatpush1.bf16.msra.mxu0 %v578
      %616 = vmatprep.subr.bf16.mxu0 %v577
      %617 = vmatpush1.bf16.msra.mxu0 %v576
      %618 = vmatprep.subr.bf16.mxu0 0
      %619 = vmatpush2.bf16.msra.mxu0 0
      %620 = vmatprep.subr.bf16.mxu0 0
      %621 = vmatpush2.bf16.msra.mxu0 0
      %622 = vmatprep.subr.bf16.mxu0 0
      %623 = vmatpush2.bf16.msra.mxu0 0
      %624 = vmatprep.subr.bf16.mxu0 0
      %625 = vmatpush2.bf16.msra.mxu0 0
      %626 = vmatprep.subr.bf16.mxu0 0
      %627 = vmatpush2.bf16.msra.mxu0 0
      %628 = vmatprep.subr.bf16.mxu0 0
      %629 = vmatpush2.bf16.msra.mxu0 0
      %630 = vmatprep.subr.bf16.mxu0 0
      %631 = vmatpush2.bf16.msra.mxu0 0
      %632 = vmatprep.subr.bf16.mxu0 0
      %633 = vmatpush2.bf16.msra.mxu0 0
      %634 = vmatprep.mubr.bf16.mxu0 0
      %635 = vmatmul.mubr.bf16.gmra.mxu0 %v594
      %v636 = vpop.f32.mrf.mxu0
      %v637 = vadd.f32 %v591, %v636
      %v638 = vpop.f32.mrf.mxu0
      %v639 = vadd.f32 %v591, %v638
      %v640 = vpop.f32.mrf.mxu0
      %v641 = vpop.f32.mrf.mxu0
      %642 = vdwg.mxu0
      %v643 = vmax.f32 %v637, 0.0
      %v644 = vmax.f32 %v639, 0.0
      %645 = vst [vmem:[%s251] sm:$0xff] %v643
      %646 = vst [vmem:[%s251 + $0x8] sm:$0xff] %v644
      %p647 = scmp.lt.s32.totalorder %s17, 1
      %s648 = scalar_select %p647, %s17, 1
      %s649 = smul.addr %s648, 2
      %s650 = smul.addr %s649, 8
      %s651 = scalar_lea.vmem %s6, %s650
      // Predicated region
      $region45: #{input_forward_nchw.1} parent=43 // pred_check
        %p652 = pneg %p166
      $region46: #{input_forward_nchw.1} parent=43 // pred_check_branch
        %654 = sbr.rel (%p652) target = $region48
      $region47: #{input_forward_nchw.1} parent=43 // pred_region
        _
      $region48: #{input_forward_nchw.1} parent=43 // pred_fallthru
        _
    $region44: #{input_forward_nchw.1} parent=5 // pred_fallthru
      _
    %p655 = scmp.le.s32.totalorder 2, %s12
    // Predicated region
    $region49: #{input_forward_nchw.1} parent=5 // pred_check
      %p656 = pneg %p655
    $region50: #{input_forward_nchw.1} parent=5 // pred_check_branch
      %658 = sbr.rel (%p656) target = $region52
    $region51: #{input_forward_nchw.1} parent=5 // pred_region
      %s659 = ssub.s32 %s12, 2
      // Predicated region
      $region53: #{input_forward_nchw.1} parent=51 // pred_check
        %p660 = pneg %p172
      $region54: #{input_forward_nchw.1} parent=51 // pred_check_branch
        %662 = sbr.rel (%p660) target = $region56
      $region55: #{input_forward_nchw.1} parent=51 // pred_region
        %p663 = scmp.lt.s32.totalorder %s18, 1
        %s664 = scalar_select %p663, %s18, 1
        %s665 = smul.addr %s664, 2
        %s666 = smul.addr %s665, 8
        %s667 = scalar_lea.vmem %s6, %s666
      $region56: #{input_forward_nchw.1} parent=51 // pred_fallthru
        _
    $region52: #{input_forward_nchw.1} parent=5 // pred_fallthru
      _
  $region6: #{input_forward_nchw.1} parent=0 // loop_footer
    %s16 = sadd.s32 1, %s12
  $region7: #{input_forward_nchw.1} parent=0 // loop_footer_branch
    %11 = sbr.rel target = $region3
  $region8: #{input_forward_nchw.1} parent=0 // loop_exit
    _

</llo_original>
